<compile_context>
chip_gen: v7x
topology: tpu7x:2x2x1
jax: 0.10.0
libtpu: 0.0.40
codegen_flags: <defaults>
</compile_context>

<pallas_src>
import functools
import math

import jax
import jax.numpy as jnp
from jax.experimental import pallas as pl
from jax.experimental.pallas import tpu as pltpu


def _round_up(x, m):
    return (x + m - 1) // m * m


def _timestep_embedder_kernel(t_ref, w1c_ref, w1s_ref, b1_ref, w2_ref, b2_ref,
                              out_ref, *, half, max_period):
    # t_ref:    (TN, 1)       f32
    # w1c_ref:  (half, Hp)    bf16  (rows of w1 hit by cos(args))
    # w1s_ref:  (half, Hp)    bf16  (rows of w1 hit by sin(args))
    # b1_ref:   (1, Hp)       f32
    # w2_ref:   (Hp, Hp)      bf16
    # b2_ref:   (1, Hp)       f32
    # out_ref:  (TN, Hp)      f32
    t = t_ref[...]                                                  # (TN, 1)

    # Frequency table computed in-kernel (same op order as the reference so
    # the f32 values match bitwise): exp(-log(max_period) * i / half).
    idx = jax.lax.broadcasted_iota(jnp.int32, (1, half), 1).astype(jnp.float32)
    freqs = jnp.exp(-math.log(max_period) * idx / half)             # (1, half)

    args = t * freqs                                                # (TN, half)
    cos_e = jnp.cos(args).astype(w1c_ref.dtype)                     # bf16
    sin_e = jnp.sin(args).astype(w1s_ref.dtype)                     # bf16

    # Linear 1 (two K=half MXU pushes into one f32 accumulator) + bias + SiLU.
    h = (jnp.dot(cos_e, w1c_ref[...], preferred_element_type=jnp.float32)
         + jnp.dot(sin_e, w1s_ref[...], preferred_element_type=jnp.float32)
         + b1_ref[...])
    h = h * jax.nn.sigmoid(h)                                       # SiLU (f32)

    # Linear 2 (bf16 inputs, f32 accumulation) + bias.
    out = jnp.dot(h.astype(w2_ref.dtype), w2_ref[...],
                  preferred_element_type=jnp.float32) + b2_ref[...]
    out_ref[...] = out.astype(out_ref.dtype)


def timestep_embedder(t, params, frequency_embedding_size=256,
                      max_period=10000.0, weight_dtype=jnp.bfloat16,
                      row_tile=256):
    """t: (N,) float array. Returns (N, hidden_size) f32."""
    w1, b1, w2, b2 = params["w1"], params["b1"], params["w2"], params["b2"]
    n = t.shape[0]
    hidden = w1.shape[1]
    # TODO(synk): odd frequency_embedding_size (PyTorch zero-pads one column)
    # is not handled; the module default (256) is even.
    assert frequency_embedding_size % 2 == 0
    half = frequency_embedding_size // 2

    # Lane-dense output: pad hidden to a multiple of 128; pad N to the row tile.
    hpad = _round_up(hidden, 128)
    tile_n = min(row_tile, _round_up(n, 8))
    npad = _round_up(n, tile_n)

    wdt = jnp.dtype(weight_dtype)
    w1c = jnp.zeros((half, hpad), wdt).at[:, :hidden].set(
        w1[:half].astype(wdt))
    w1s = jnp.zeros((half, hpad), wdt).at[:, :hidden].set(
        w1[half:].astype(wdt))
    w2p = jnp.zeros((hpad, hpad), wdt).at[:hidden, :hidden].set(
        w2.astype(wdt))
    b1p = jnp.zeros((1, hpad), jnp.float32).at[0, :hidden].set(
        b1.reshape(-1).astype(jnp.float32))
    b2p = jnp.zeros((1, hpad), jnp.float32).at[0, :hidden].set(
        b2.reshape(-1).astype(jnp.float32))
    t2d = jnp.zeros((npad, 1), jnp.float32).at[:n, 0].set(
        t.astype(jnp.float32))

    # Advisory cost + explicit VMEM budget (weights are double-buffered by the
    # pipeliner even though their block index is constant; leave headroom).
    wbytes = (w1c.size + w1s.size + w2p.size) * wdt.itemsize
    bbytes = (b1p.size + b2p.size) * 4
    cost = pl.CostEstimate(
        flops=2 * npad * (2 * half * hpad + hpad * hpad),
        transcendentals=npad * (2 * half + hpad) + half,
        bytes_accessed=wbytes + bbytes + npad * 4 + npad * hpad * 4,
    )
    vmem_need = (2 * (wbytes + bbytes)                      # weights (dbl buf)
                 + 2 * tile_n * (4 + hpad * 4)              # t / out tiles
                 + 4 * tile_n * (half + hpad) * 4)          # in-kernel temps
    vmem_limit = int(min(max(vmem_need, 16 * 1024 * 1024), 48 * 1024 * 1024))

    kernel = functools.partial(_timestep_embedder_kernel,
                               half=half, max_period=max_period)

    out_full = pl.pallas_call(
        kernel,
        out_shape=jax.ShapeDtypeStruct((npad, hpad), jnp.float32),
        grid_spec=pltpu.PrefetchScalarGridSpec(
            num_scalar_prefetch=0,
            grid=(npad // tile_n,),
            in_specs=[
                pl.BlockSpec((tile_n, 1), lambda i: (i, 0)),   # t rows
                pl.BlockSpec((half, hpad), lambda i: (0, 0)),  # w1 (cos half)
                pl.BlockSpec((half, hpad), lambda i: (0, 0)),  # w1 (sin half)
                pl.BlockSpec((1, hpad), lambda i: (0, 0)),     # b1
                pl.BlockSpec((hpad, hpad), lambda i: (0, 0)),  # w2
                pl.BlockSpec((1, hpad), lambda i: (0, 0)),     # b2
            ],
            out_specs=pl.BlockSpec((tile_n, hpad), lambda i: (i, 0)),
        ),
        compiler_params=pltpu.CompilerParams(
            dimension_semantics=("parallel",),
            vmem_limit_bytes=vmem_limit,
        ),
        cost_estimate=cost,
    )(t2d, w1c, w1s, b1p, w2p, b2p)

    return out_full[:n, :hidden]


def init_params(key, hidden_size, frequency_embedding_size=256):
    """Deterministic synthetic params; shapes match nn.Linear of the module
    (weights stored transposed: (in_features, out_features))."""
    k1, k2, k3, k4 = jax.random.split(key, 4)
    s1 = 1.0 / math.sqrt(frequency_embedding_size)
    s2 = 1.0 / math.sqrt(hidden_size)
    return {
        "w1": jax.random.uniform(k1, (frequency_embedding_size, hidden_size),
                                 jnp.float32, -s1, s1),
        "b1": jax.random.uniform(k2, (hidden_size,), jnp.float32, -s1, s1),
        "w2": jax.random.uniform(k3, (hidden_size, hidden_size),
                                 jnp.float32, -s2, s2),
        "b2": jax.random.uniform(k4, (hidden_size,), jnp.float32, -s2, s2),
    }


def _reference(t, params, frequency_embedding_size=256, max_period=10000.0,
               weight_dtype=jnp.bfloat16):
    """Pure-JAX reference with the same bf16 weight / activation casts the
    PyTorch module would apply if its Linear weights were bf16."""
    half = frequency_embedding_size // 2
    freqs = jnp.exp(
        -math.log(max_period) * jnp.arange(half, dtype=jnp.float32) / half)
    args = t.astype(jnp.float32)[:, None] * freqs[None]
    emb = jnp.concatenate([jnp.cos(args), jnp.sin(args)],
                          axis=-1).astype(weight_dtype)
    w1 = params["w1"].astype(weight_dtype)
    w2 = params["w2"].astype(weight_dtype)
    h = (jnp.dot(emb, w1, preferred_element_type=jnp.float32)
         + params["b1"].astype(jnp.float32)[None, :])
    h = h * jax.nn.sigmoid(h)
    out = (jnp.dot(h.astype(weight_dtype), w2,
                   preferred_element_type=jnp.float32)
           + params["b2"].astype(jnp.float32)[None, :])
    return out


if __name__ == "__main__":
    key = jax.random.PRNGKey(0)
    k_t, k_p = jax.random.split(key)

    N = 8                 # batch of timesteps
    HIDDEN = 32           # hidden_size
    FREQ = 256            # frequency_embedding_size (module default)

    t = jax.random.uniform(k_t, (N,), jnp.float32, 0.0, 1000.0)
    params = init_params(k_p, HIDDEN, FREQ)

    out = timestep_embedder(t, params, frequency_embedding_size=FREQ)
    out = jax.block_until_ready(out)

    ref = _reference(t, params, frequency_embedding_size=FREQ)
    assert out.shape == (N, HIDDEN)
    assert out.dtype == jnp.float32
    assert jnp.allclose(out, ref, atol=2e-2, rtol=2e-2)
    print("KERNEL_OK")
</pallas_src>

<mosaic_0001>
module attributes {stable_mosaic.version = 11 : i64} {
  func.func @_timestep_embedder_kernel(%arg0: i32, %arg1: memref<8x1xf32, #tpu.memory_space<vmem>>, %arg2: memref<128x128xbf16, #tpu.memory_space<vmem>>, %arg3: memref<128x128xbf16, #tpu.memory_space<vmem>>, %arg4: memref<1x128xf32, #tpu.memory_space<vmem>>, %arg5: memref<128x128xbf16, #tpu.memory_space<vmem>>, %arg6: memref<1x128xf32, #tpu.memory_space<vmem>>, %arg7: memref<8x128xf32, #tpu.memory_space<vmem>>) attributes {dimension_semantics = [#tpu.dimension_semantics<parallel>], iteration_bounds = array<i64: 1>, scalar_prefetch = 0 : i64, scratch_operands = 0 : i64, tpu.core_type = #tpu.core_type<tc>, window_params = [{transform_indices = @transform_0, window_bounds = array<i64: 8, 1>}, {pipeline_mode = #tpu.pipeline_mode<synchronous>, transform_indices = @transform_1, window_bounds = array<i64: 128, 128>}, {pipeline_mode = #tpu.pipeline_mode<synchronous>, transform_indices = @transform_2, window_bounds = array<i64: 128, 128>}, {pipeline_mode = #tpu.pipeline_mode<synchronous>, transform_indices = @transform_3, window_bounds = array<i64: 1, 128>}, {pipeline_mode = #tpu.pipeline_mode<synchronous>, transform_indices = @transform_4, window_bounds = array<i64: 128, 128>}, {pipeline_mode = #tpu.pipeline_mode<synchronous>, transform_indices = @transform_5, window_bounds = array<i64: 1, 128>}, {transform_indices = @transform_6, window_bounds = array<i64: 8, 128>}]} {
    %c0 = arith.constant 0 : index
    %c0_0 = arith.constant 0 : index
    %0 = vector.load %arg1[%c0, %c0_0] : memref<8x1xf32, #tpu.memory_space<vmem>>, vector<8x1xf32>
    %1 = tpu.iota {dimensions = array<i32: 1>} : vector<1x128xi32>
    %2 = arith.sitofp %1 : vector<1x128xi32> to vector<1x128xf32>
    %cst = arith.constant -9.21034049 : f32
    %3 = vector.broadcast %cst : f32 to vector<1x128xf32>
    %4 = arith.mulf %3, %2 : vector<1x128xf32>
    %cst_1 = arith.constant 1.280000e+02 : f32
    %5 = vector.broadcast %cst_1 : f32 to vector<1x128xf32>
    %6 = arith.divf %4, %5 : vector<1x128xf32>
    %7 = math.exp %6 : vector<1x128xf32>
    %8 = vector.broadcast %0 : vector<8x1xf32> to vector<8x128xf32>
    %9 = vector.broadcast %7 : vector<1x128xf32> to vector<8x128xf32>
    %10 = arith.mulf %8, %9 : vector<8x128xf32>
    %11 = math.cos %10 : vector<8x128xf32>
    %12 = arith.truncf %11 : vector<8x128xf32> to vector<8x128xbf16>
    %13 = math.sin %10 : vector<8x128xf32>
    %14 = arith.truncf %13 : vector<8x128xf32> to vector<8x128xbf16>
    %c0_2 = arith.constant 0 : index
    %c0_3 = arith.constant 0 : index
    %15 = vector.load %arg2[%c0_2, %c0_3] : memref<128x128xbf16, #tpu.memory_space<vmem>>, vector<128x128xbf16>
    %cst_4 = arith.constant dense<0.000000e+00> : vector<8x128xf32>
    %16 = tpu.matmul %12, %15, %cst_4 {dimension_numbers = #tpu.dot_dimension_numbers<[1], [0], [0], [1], [0, 0, 1, 1], [], []>} : vector<8x128xbf16>, vector<128x128xbf16>, vector<8x128xf32> -> vector<8x128xf32>
    %c0_5 = arith.constant 0 : index
    %c0_6 = arith.constant 0 : index
    %17 = vector.load %arg3[%c0_5, %c0_6] : memref<128x128xbf16, #tpu.memory_space<vmem>>, vector<128x128xbf16>
    %cst_7 = arith.constant dense<0.000000e+00> : vector<8x128xf32>
    %18 = tpu.matmul %14, %17, %cst_7 {dimension_numbers = #tpu.dot_dimension_numbers<[1], [0], [0], [1], [0, 0, 1, 1], [], []>} : vector<8x128xbf16>, vector<128x128xbf16>, vector<8x128xf32> -> vector<8x128xf32>
    %19 = arith.addf %16, %18 : vector<8x128xf32>
    %c0_8 = arith.constant 0 : index
    %c0_9 = arith.constant 0 : index
    %20 = vector.load %arg4[%c0_8, %c0_9] : memref<1x128xf32, #tpu.memory_space<vmem>>, vector<1x128xf32>
    %21 = vector.broadcast %20 : vector<1x128xf32> to vector<8x128xf32>
    %22 = arith.addf %19, %21 : vector<8x128xf32>
    %23 = arith.negf %22 : vector<8x128xf32>
    %24 = math.exp %23 : vector<8x128xf32>
    %cst_10 = arith.constant 1.000000e+00 : f32
    %25 = vector.broadcast %cst_10 : f32 to vector<8x128xf32>
    %26 = arith.addf %25, %24 : vector<8x128xf32>
    %27 = arith.divf %25, %26 : vector<8x128xf32>
    %28 = arith.mulf %22, %27 : vector<8x128xf32>
    %29 = arith.truncf %28 : vector<8x128xf32> to vector<8x128xbf16>
    %c0_11 = arith.constant 0 : index
    %c0_12 = arith.constant 0 : index
    %30 = vector.load %arg5[%c0_11, %c0_12] : memref<128x128xbf16, #tpu.memory_space<vmem>>, vector<128x128xbf16>
    %cst_13 = arith.constant dense<0.000000e+00> : vector<8x128xf32>
    %31 = tpu.matmul %29, %30, %cst_13 {dimension_numbers = #tpu.dot_dimension_numbers<[1], [0], [0], [1], [0, 0, 1, 1], [], []>} : vector<8x128xbf16>, vector<128x128xbf16>, vector<8x128xf32> -> vector<8x128xf32>
    %c0_14 = arith.constant 0 : index
    %c0_15 = arith.constant 0 : index
    %32 = vector.load %arg6[%c0_14, %c0_15] : memref<1x128xf32, #tpu.memory_space<vmem>>, vector<1x128xf32>
    %33 = vector.broadcast %32 : vector<1x128xf32> to vector<8x128xf32>
    %34 = arith.addf %31, %33 : vector<8x128xf32>
    %c0_16 = arith.constant 0 : index
    %c0_17 = arith.constant 0 : index
    %35 = vector.load %arg7[%c0_16, %c0_17] : memref<8x128xf32, #tpu.memory_space<vmem>>, vector<8x128xf32>
    tpu.vector_store %arg7[%c0_16, %c0_17], %34 {strides = array<i32>} : memref<8x128xf32, #tpu.memory_space<vmem>>, vector<8x128xf32>,
    return
  }
  func.func @transform_0(%arg0: i32) -> (i32, i32) {
    %c0_i32 = arith.constant 0 : i32
    %c0_i32_0 = arith.constant 0 : i32
    return %arg0, %c0_i32 : i32, i32
  }
  func.func @transform_1(%arg0: i32) -> (i32, i32) {
    %c0_i32 = arith.constant 0 : i32
    %c0_i32_0 = arith.constant 0 : i32
    %c0_i32_1 = arith.constant 0 : i32
    return %c0_i32, %c0_i32_0 : i32, i32
  }
  func.func @transform_2(%arg0: i32) -> (i32, i32) {
    %c0_i32 = arith.constant 0 : i32
    %c0_i32_0 = arith.constant 0 : i32
    %c0_i32_1 = arith.constant 0 : i32
    return %c0_i32, %c0_i32_0 : i32, i32
  }
  func.func @transform_3(%arg0: i32) -> (i32, i32) {
    %c0_i32 = arith.constant 0 : i32
    %c0_i32_0 = arith.constant 0 : i32
    %c0_i32_1 = arith.constant 0 : i32
    return %c0_i32, %c0_i32_0 : i32, i32
  }
  func.func @transform_4(%arg0: i32) -> (i32, i32) {
    %c0_i32 = arith.constant 0 : i32
    %c0_i32_0 = arith.constant 0 : i32
    %c0_i32_1 = arith.constant 0 : i32
    return %c0_i32, %c0_i32_0 : i32, i32
  }
  func.func @transform_5(%arg0: i32) -> (i32, i32) {
    %c0_i32 = arith.constant 0 : i32
    %c0_i32_0 = arith.constant 0 : i32
    %c0_i32_1 = arith.constant 0 : i32
    return %c0_i32, %c0_i32_0 : i32, i32
  }
  func.func @transform_6(%arg0: i32) -> (i32, i32) {
    %c0_i32 = arith.constant 0 : i32
    %c0_i32_0 = arith.constant 0 : i32
    return %arg0, %c0_i32 : i32, i32
  }
}

</mosaic_0001>

<llo_original>
// kernel: tpu_custom_call.1
$region0: #{tpu_custom_call.1}
  #allocation0 [shape = 'u32[]', space=smem, size = 0x4, offset = 0x4, fixed_abs, tag = 'smem constant byte address 0x4 - core index']
  #allocation1 [shape = 'u32[144,128]{1,0:T(1,128)}', space=vmem, size = 0x12000, scoped, tag = 'internal scratch']
  %s0 = inlined_call_operand.vmem [shape: f32[8,1], index: 0, kind: input, shape index: {}]
  %s1 = inlined_call_operand.hbm [shape: bf16[128,128], index: 1, kind: input, shape index: {}]
  %s2 = inlined_call_operand.hbm [shape: bf16[128,128], index: 2, kind: input, shape index: {}]
  %s3 = inlined_call_operand.vmem [shape: f32[1,128], index: 3, kind: input, shape index: {}]
  %s4 = inlined_call_operand.hbm [shape: bf16[128,128], index: 4, kind: input, shape index: {}]
  %s5 = inlined_call_operand.vmem [shape: f32[1,128], index: 5, kind: input, shape index: {}]
  %s6 = inlined_call_operand.hbm [shape: f32[8,128], index: 6, kind: output, shape index: {}]
  %s7 = sld [smem:[#allocation0]]
  $region46: #{tpu_custom_call.1} parent=0
    _
  %s9 = ssub.s32 1, %s7
  %s10 = scalar_select 0, %s9, %s7
  $region1: #{tpu_custom_call.1} parent=0
    #allocation2 [shape = 'u8[32768]{0}', space=vmem, size = 0x8000, scoped, tag = 'input window, operand 1, single buffered']
    #allocation3 [shape = 's32[1]{0}', space=sflag, size = 0x4, scoped, tag = 'scoped memory for tpu_custom_call.1']
    #allocation4 [shape = 's32[1]{0}', space=sflag, size = 0x4, scoped, tag = 'scoped memory for tpu_custom_call.1']
    #allocation5 [shape = 'u8[32768]{0}', space=vmem, size = 0x8000, scoped, tag = 'input window, operand 2, single buffered']
    #allocation6 [shape = 's32[1]{0}', space=sflag, size = 0x4, scoped, tag = 'scoped memory for tpu_custom_call.1']
    #allocation7 [shape = 'u8[32768]{0}', space=vmem, size = 0x8000, scoped, tag = 'input window, operand 4, single buffered']
    #allocation8 [shape = 'u8[4096]{0}', space=vmem, size = 0x1000, scoped, tag = 'output window, operand 0, single buffered']
    %11 = vsyncpa [#allocation3], 0
    %12 = vsyncpa [#allocation6], 0
    %13 = vsyncpa [#allocation4], 0
    // Predicated region
    $region2: #{tpu_custom_call.1} parent=1 // pred_check
      _
    $region3: #{tpu_custom_call.1} parent=1 // pred_check_branch
      %15 = sbr.rel (0) target = $region5
    $region4: #{tpu_custom_call.1} parent=1 // pred_region
      _
    $region5: #{tpu_custom_call.1} parent=1 // pred_fallthru
      _
    // Predicated region
    $region6: #{tpu_custom_call.1} parent=1 // pred_check
      _
    $region7: #{tpu_custom_call.1} parent=1 // pred_check_branch
      %17 = sbr.rel (0) target = $region9
    $region8: #{tpu_custom_call.1} parent=1 // pred_region
      %s19 = ssub.s32 1024, 1024
      %20 = vsyncadd [#allocation3], %s19
      %s21 = sshll.u32 [#allocation2], 4
      %s22 = int_to_ptr.vmem [resolvable:$true] %s21
      %27 = dma.hbm_to_vmem [thread:$0]  %s1, 1024, %s22, [#allocation3], 64, 64, 4
    $region9: #{tpu_custom_call.1} parent=1 // pred_fallthru
      _
    // Predicated region
    $region10: #{tpu_custom_call.1} parent=1 // pred_check
      _
    $region11: #{tpu_custom_call.1} parent=1 // pred_check_branch
      %29 = sbr.rel (0) target = $region13
    $region12: #{tpu_custom_call.1} parent=1 // pred_region
      %s31 = ssub.s32 1024, 1024
      %32 = vsyncadd [#allocation6], %s31
      %s33 = sshll.u32 [#allocation5], 4
      %s34 = int_to_ptr.vmem [resolvable:$true] %s33
      %39 = dma.hbm_to_vmem [thread:$0]  %s2, 1024, %s34, [#allocation6], 64, 64, 4
    $region13: #{tpu_custom_call.1} parent=1 // pred_fallthru
      _
    // Predicated region
    $region14: #{tpu_custom_call.1} parent=1 // pred_check
      _
    $region15: #{tpu_custom_call.1} parent=1 // pred_check_branch
      %41 = sbr.rel (0) target = $region17
    $region16: #{tpu_custom_call.1} parent=1 // pred_region
      _
    $region17: #{tpu_custom_call.1} parent=1 // pred_fallthru
      _
    // Predicated region
    $region18: #{tpu_custom_call.1} parent=1 // pred_check
      _
    $region19: #{tpu_custom_call.1} parent=1 // pred_check_branch
      %43 = sbr.rel (0) target = $region21
    $region20: #{tpu_custom_call.1} parent=1 // pred_region
      %s45 = ssub.s32 1024, 1024
      %46 = vsyncadd [#allocation6], %s45
      %s47 = sshll.u32 [#allocation7], 4
      %s48 = int_to_ptr.vmem [resolvable:$true] %s47
      %53 = dma.hbm_to_vmem [thread:$0]  %s4, 1024, %s48, [#allocation6], 64, 64, 4
    $region21: #{tpu_custom_call.1} parent=1 // pred_fallthru
      _
    // Predicated region
    $region22: #{tpu_custom_call.1} parent=1 // pred_check
      _
    $region23: #{tpu_custom_call.1} parent=1 // pred_check_branch
      %55 = sbr.rel (0) target = $region25
    $region24: #{tpu_custom_call.1} parent=1 // pred_region
      _
    $region25: #{tpu_custom_call.1} parent=1 // pred_fallthru
      _
    // Predicated region
    $region26: #{tpu_custom_call.1} parent=1 // pred_check
      _
    $region27: #{tpu_custom_call.1} parent=1 // pred_check_branch
      %57 = sbr.rel (0) target = $region29
    $region28: #{tpu_custom_call.1} parent=1 // pred_region
      %58 = dma.done [#allocation3], 1024
    $region29: #{tpu_custom_call.1} parent=1 // pred_fallthru
      _
    // Predicated region
    $region30: #{tpu_custom_call.1} parent=1 // pred_check
      _
    $region31: #{tpu_custom_call.1} parent=1 // pred_check_branch
      %60 = sbr.rel (0) target = $region33
    $region32: #{tpu_custom_call.1} parent=1 // pred_region
      %61 = dma.done [#allocation6], 1024
    $region33: #{tpu_custom_call.1} parent=1 // pred_fallthru
      _
    // Predicated region
    $region34: #{tpu_custom_call.1} parent=1 // pred_check
      _
    $region35: #{tpu_custom_call.1} parent=1 // pred_check_branch
      %63 = sbr.rel (0) target = $region37
    $region36: #{tpu_custom_call.1} parent=1 // pred_region
      %64 = dma.done [#allocation6], 1024
    $region37: #{tpu_custom_call.1} parent=1 // pred_fallthru
      _
    %v66 = vld [vmem:[%s0] sm:$0xff]
    %v67 = vlaneseq
    %v68 = vand.u32 %v67, 127
    %v69 = vcvt.s32.f32 %v68
    %v70 = vmul.f32 %v69, -9.2103405
    %v71 = vrcp.pop 128.0
    %v72 = vmul.f32 %v70, %v71
    %v73 = vmul.f32 %v72, 1.442695
    %v74 = vpow.pop %v73
    %76 = vset.pattern.permute.xlu0 0
    %77 = vperm.xlu0 %76, %v66
    %v78 = vpop.permute.xlu0 %77
    %v80 = vmul.f32 %v78, %v74
    %v81 = vand.u32 2147483647, %v80
    %vm82 = vcmp.le.f32.partialorder %v81, 0.7853982
    %vm83 = vcmp.lt.s32.totalorder %v80, 0
    %v84 = vand.u32 %v80, 2139095040
    %v85 = vshrl.u32 %v84, 23
    %v86 = vsub.s32 %v85, 127
    %v87 = vand.u32 2147483647, %v80
    %v88 = vand.u32 %v87, 8388607
    %v89 = vor.u32 %v88, 8388608
    %v90 = vsub.s32 0, %v89
    %v91 = vadd.s32 %v86, 1
    %vm92 = vcmp.gt.s32.totalorder %v91, 0
    %v93 = vsel %vm92, %v91, 0
    %v94 = vshrl.u32 %v93, 5
    %v95 = vand.u32 %v93, 31
    %v96 = vsub.s32 32, %v95
    %v97 = vshrl.u32 683565275, %v96
    %v98 = vshll.u32 683565275, %v95
    %v99 = vshrl.u32 2475754826, %v96
    %v100 = vor.u32 %v98, %v99
    %v101 = vshll.u32 2475754826, %v95
    %v102 = vshrl.u32 2131351028, %v96
    %v103 = vor.u32 %v101, %v102
    %v104 = vshll.u32 2131351028, %v95
    %v105 = vshrl.u32 2102212464, %v96
    %v106 = vor.u32 %v104, %v105
    %v107 = vshll.u32 2102212464, %v95
    %v108 = vshrl.u32 920167782, %v96
    %v109 = vor.u32 %v107, %v108
    %v110 = vshll.u32 920167782, %v95
    %v111 = vshrl.u32 1326507024, %v96
    %v112 = vor.u32 %v110, %v111
    %vm113 = vcmp.lt.s32.totalorder %v94, 1
    %vm114 = vcmp.lt.s32.totalorder %v94, 2
    %vm115 = vcmp.lt.s32.totalorder %v94, 3
    %vm116 = vcmp.lt.s32.totalorder %v94, 4
    %v117 = vsel %vm113, %v97, %v100
    %v118 = vsel %vm116, %v106, 2102212464
    %v119 = vsel %vm115, %v103, %v118
    %v120 = vsel %vm114, %v117, %v119
    %v121 = vsel %vm113, %v100, %v103
    %v122 = vsel %vm116, %v109, 920167782
    %v123 = vsel %vm115, %v106, %v122
    %v124 = vsel %vm114, %v121, %v123
    %v125 = vsel %vm113, %v103, %v106
    %v126 = vsel %vm116, %v112, 1326507024
    %v127 = vsel %vm115, %v109, %v126
    %v128 = vsel %vm114, %v125, %v127
    %v129 = vshll.u32 %v89, 8
    %v130 = vmul.u32.u64.compose %v129, %v128
    %v131 = vextract.low.u32 %v130
    %v132 = vextract.high.u32 %v130
    %v133 = vmul.u32.u64.compose %v129, %v124
    %v134 = vextract.low.u32 %v133
    %v135 = vextract.high.u32 %v133
    %v136 = vmul.u32 %v129, %v120
    %v137 = vadd.s32 %v132, %v134
    %vm138 = vc.u32 %v132, %v134
    %v139 = vadd.s32 %v135, 1
    %v140 = vsel %vm138, %v139, %v135
    %v141 = vadd.s32 %v136, %v140
    %v142 = vadd.s32 %v141, 536870912
    %v143 = vshrl.u32 %v142, 30
    %v144 = vshll.u32 %v143, 30
    %v145 = vsub.s32 %v141, %v144
    %vm146 = vcmp.lt.s32.totalorder %v145, 0
    %v147 = vsub.s32 0, %v145
    %v148 = vsel %vm146, %v147, %v145
    %v149 = vclz %v148
    %v150 = vsub.s32 %v149, 2
    %vm151 = vcmp.gt.s32.totalorder 0, %v150
    %v152 = vsel %vm151, 0, %v150
    %v153 = vsub.s32 32, %v152
    %v154 = vshll.u32 %v145, %v152
    %v155 = vshrl.u32 %v137, %v153
    %v156 = vor.u32 %v154, %v155
    %v157 = vsub.s32 4294967266, %v152
    %v158 = vadd.s32 %v157, 127
    %v159 = vshll.u32 %v158, 23
    %v160 = vor.u32 4788187, %v159
    %v161 = vand.u32 2147483647, %v160
    %v163 = vcvt.s32.f32 %v156
    %v164 = vmul.f32 %v163, %v161
    %v165 = vxor.u32 %v164, 2147483648
    %v166 = vsel %vm83, %v165, %v164
    %v167 = vsub.s32 4, %v143
    %v168 = vsel %vm83, %v167, %v143
    %v169 = vsel %vm82, %v80, %v166
    %v170 = vsel %vm82, 0, %v168
    %v171 = vcosq.f32.pop %v169
    %v172 = vsinq.f32.pop %v169
    %vm173 = vweird.f32 %v80
    %v174 = vand.u32 %v170, 3
    %vm175 = vcmp.lt.s32.totalorder %v174, 2
    %vm176 = vcmp.eq.s32.totalorder %v174, 0
    %v177 = vxor.u32 %v172, 2147483648
    %v178 = vsel %vm176, %v171, %v177
    %vm179 = vcmp.eq.s32.totalorder %v174, 2
    %v180 = vxor.u32 %v171, 2147483648
    %v181 = vsel %vm179, %v180, %v172
    %v182 = vsel %vm175, %v178, %v181
    %v183 = vsel %vm173, nan, %v182
    %v184 = vpack.c.bf16 %v183, %v183
    %v185 = vand.u32 2147483647, %v80
    %vm186 = vcmp.le.f32.partialorder %v185, 0.7853982
    %vm187 = vcmp.lt.s32.totalorder %v80, 0
    %v188 = vand.u32 %v80, 2139095040
    %v189 = vshrl.u32 %v188, 23
    %v190 = vsub.s32 %v189, 127
    %v191 = vand.u32 2147483647, %v80
    %v192 = vand.u32 %v191, 8388607
    %v193 = vor.u32 %v192, 8388608
    %v194 = vsub.s32 0, %v193
    %v195 = vadd.s32 %v190, 1
    %vm196 = vcmp.gt.s32.totalorder %v195, 0
    %v197 = vsel %vm196, %v195, 0
    %v198 = vshrl.u32 %v197, 5
    %v199 = vand.u32 %v197, 31
    %v200 = vsub.s32 32, %v199
    %v201 = vshrl.u32 683565275, %v200
    %v202 = vshll.u32 683565275, %v199
    %v203 = vshrl.u32 2475754826, %v200
    %v204 = vor.u32 %v202, %v203
    %v205 = vshll.u32 2475754826, %v199
    %v206 = vshrl.u32 2131351028, %v200
    %v207 = vor.u32 %v205, %v206
    %v208 = vshll.u32 2131351028, %v199
    %v209 = vshrl.u32 2102212464, %v200
    %v210 = vor.u32 %v208, %v209
    %v211 = vshll.u32 2102212464, %v199
    %v212 = vshrl.u32 920167782, %v200
    %v213 = vor.u32 %v211, %v212
    %v214 = vshll.u32 920167782, %v199
    %v215 = vshrl.u32 1326507024, %v200
    %v216 = vor.u32 %v214, %v215
    %vm217 = vcmp.lt.s32.totalorder %v198, 1
    %vm218 = vcmp.lt.s32.totalorder %v198, 2
    %vm219 = vcmp.lt.s32.totalorder %v198, 3
    %vm220 = vcmp.lt.s32.totalorder %v198, 4
    %v221 = vsel %vm217, %v201, %v204
    %v222 = vsel %vm220, %v210, 2102212464
    %v223 = vsel %vm219, %v207, %v222
    %v224 = vsel %vm218, %v221, %v223
    %v225 = vsel %vm217, %v204, %v207
    %v226 = vsel %vm220, %v213, 920167782
    %v227 = vsel %vm219, %v210, %v226
    %v228 = vsel %vm218, %v225, %v227
    %v229 = vsel %vm217, %v207, %v210
    %v230 = vsel %vm220, %v216, 1326507024
    %v231 = vsel %vm219, %v213, %v230
    %v232 = vsel %vm218, %v229, %v231
    %v233 = vshll.u32 %v193, 8
    %v234 = vmul.u32.u64.compose %v233, %v232
    %v235 = vextract.low.u32 %v234
    %v236 = vextract.high.u32 %v234
    %v237 = vmul.u32.u64.compose %v233, %v228
    %v238 = vextract.low.u32 %v237
    %v239 = vextract.high.u32 %v237
    %v240 = vmul.u32 %v233, %v224
    %v241 = vadd.s32 %v236, %v238
    %vm242 = vc.u32 %v236, %v238
    %v243 = vadd.s32 %v239, 1
    %v244 = vsel %vm242, %v243, %v239
    %v245 = vadd.s32 %v240, %v244
    %v246 = vadd.s32 %v245, 536870912
    %v247 = vshrl.u32 %v246, 30
    %v248 = vshll.u32 %v247, 30
    %v249 = vsub.s32 %v245, %v248
    %vm250 = vcmp.lt.s32.totalorder %v249, 0
    %v251 = vsub.s32 0, %v249
    %v252 = vsel %vm250, %v251, %v249
    %v253 = vclz %v252
    %v254 = vsub.s32 %v253, 2
    %vm255 = vcmp.gt.s32.totalorder 0, %v254
    %v256 = vsel %vm255, 0, %v254
    %v257 = vsub.s32 32, %v256
    %v258 = vshll.u32 %v249, %v256
    %v259 = vshrl.u32 %v241, %v257
    %v260 = vor.u32 %v258, %v259
    %v261 = vsub.s32 4294967266, %v256
    %v262 = vadd.s32 %v261, 127
    %v263 = vshll.u32 %v262, 23
    %v264 = vor.u32 4788187, %v263
    %v265 = vand.u32 2147483647, %v264
    %v267 = vcvt.s32.f32 %v260
    %v268 = vmul.f32 %v267, %v265
    %v269 = vxor.u32 %v268, 2147483648
    %v270 = vsel %vm187, %v269, %v268
    %v271 = vsub.s32 4, %v247
    %v272 = vsel %vm187, %v271, %v247
    %v273 = vsel %vm186, %v80, %v270
    %v274 = vsel %vm186, 0, %v272
    %v275 = vcosq.f32.pop %v273
    %v276 = vsinq.f32.pop %v273
    %vm277 = vweird.f32 %v80
    %v278 = vadd.s32 %v274, 3
    %v279 = vand.u32 %v278, 3
    %vm280 = vcmp.lt.s32.totalorder %v279, 2
    %vm281 = vcmp.eq.s32.totalorder %v279, 0
    %v282 = vxor.u32 %v276, 2147483648
    %v283 = vsel %vm281, %v275, %v282
    %vm284 = vcmp.eq.s32.totalorder %v279, 2
    %v285 = vxor.u32 %v275, 2147483648
    %v286 = vsel %vm284, %v285, %v276
    %v287 = vsel %vm280, %v283, %v286
    %v288 = vsel %vm277, nan, %v287
    %v289 = vpack.c.bf16 %v288, %v288
    %v290 = vld [vmem:[#allocation2] sm:$0xf]
    %v291 = vld [vmem:[#allocation2 + $0x4] sm:$0xf]
    %v292 = vld [vmem:[#allocation2 + $0x8] sm:$0xf]
    %v293 = vld [vmem:[#allocation2 + $0xc] sm:$0xf]
    %v294 = vld [vmem:[#allocation2 + $0x10] sm:$0xf]
    %v295 = vld [vmem:[#allocation2 + $0x14] sm:$0xf]
    %v296 = vld [vmem:[#allocation2 + $0x18] sm:$0xf]
    %v297 = vld [vmem:[#allocation2 + $0x1c] sm:$0xf]
    %v298 = vld [vmem:[#allocation2 + $0x20] sm:$0xf]
    %v299 = vld [vmem:[#allocation2 + $0x24] sm:$0xf]
    %v300 = vld [vmem:[#allocation2 + $0x28] sm:$0xf]
    %v301 = vld [vmem:[#allocation2 + $0x2c] sm:$0xf]
    %v302 = vld [vmem:[#allocation2 + $0x30] sm:$0xf]
    %v303 = vld [vmem:[#allocation2 + $0x34] sm:$0xf]
    %v304 = vld [vmem:[#allocation2 + $0x38] sm:$0xf]
    %v305 = vld [vmem:[#allocation2 + $0x3c] sm:$0xf]
    %v306 = vld [vmem:[#allocation5] sm:$0xf]
    %v307 = vld [vmem:[#allocation5 + $0x4] sm:$0xf]
    %v308 = vld [vmem:[#allocation5 + $0x8] sm:$0xf]
    %v309 = vld [vmem:[#allocation5 + $0xc] sm:$0xf]
    %v310 = vld [vmem:[#allocation5 + $0x10] sm:$0xf]
    %v311 = vld [vmem:[#allocation5 + $0x14] sm:$0xf]
    %v312 = vld [vmem:[#allocation5 + $0x18] sm:$0xf]
    %v313 = vld [vmem:[#allocation5 + $0x1c] sm:$0xf]
    %v314 = vld [vmem:[#allocation5 + $0x20] sm:$0xf]
    %v315 = vld [vmem:[#allocation5 + $0x24] sm:$0xf]
    %v316 = vld [vmem:[#allocation5 + $0x28] sm:$0xf]
    %v317 = vld [vmem:[#allocation5 + $0x2c] sm:$0xf]
    %v318 = vld [vmem:[#allocation5 + $0x30] sm:$0xf]
    %v319 = vld [vmem:[#allocation5 + $0x34] sm:$0xf]
    %v320 = vld [vmem:[#allocation5 + $0x38] sm:$0xf]
    %v321 = vld [vmem:[#allocation5 + $0x3c] sm:$0xf]
    %v338 = vunpack.c.l.b16 %v306
    %v339 = vunpack.c.l.b16 %v307
    %v340 = vunpack.c.l.b16 %v308
    %v341 = vunpack.c.l.b16 %v309
    %v342 = vunpack.c.l.b16 %v310
    %v343 = vunpack.c.l.b16 %v311
    %v344 = vunpack.c.l.b16 %v312
    %v345 = vunpack.c.l.b16 %v313
    %v346 = vunpack.c.l.b16 %v314
    %v347 = vunpack.c.l.b16 %v315
    %v348 = vunpack.c.l.b16 %v316
    %v349 = vunpack.c.l.b16 %v317
    %v350 = vunpack.c.l.b16 %v318
    %v351 = vunpack.c.l.b16 %v319
    %v352 = vunpack.c.l.b16 %v320
    %v353 = vunpack.c.l.b16 %v321
    %v354 = vpack.c.b16 %v339, %v338
    %v355 = vpack.c.b16 %v341, %v340
    %v356 = vpack.c.b16 %v343, %v342
    %v357 = vpack.c.b16 %v345, %v344
    %v358 = vpack.c.b16 %v347, %v346
    %v359 = vpack.c.b16 %v349, %v348
    %v360 = vpack.c.b16 %v351, %v350
    %v361 = vpack.c.b16 %v353, %v352
    %370 = vmatprep.subr.bf16.mxu0 0
    %371 = vmatpush1.bf16.msra.mxu0 %v354
    %372 = vmatprep.subr.bf16.mxu0 0
    %373 = vmatpush1.bf16.msra.mxu0 %v355
    %374 = vmatprep.subr.bf16.mxu0 0
    %375 = vmatpush1.bf16.msra.mxu0 %v356
    %376 = vmatprep.subr.bf16.mxu0 0
    %377 = vmatpush1.bf16.msra.mxu0 %v357
    %378 = vmatprep.subr.bf16.mxu0 0
    %379 = vmatpush1.bf16.msra.mxu0 %v358
    %380 = vmatprep.subr.bf16.mxu0 0
    %381 = vmatpush1.bf16.msra.mxu0 %v359
    %382 = vmatprep.subr.bf16.mxu0 0
    %383 = vmatpush1.bf16.msra.mxu0 %v360
    %384 = vmatprep.subr.bf16.mxu0 0
    %385 = vmatpush1.bf16.msra.mxu0 %v361
    %386 = vmatprep.subr.bf16.mxu0 0
    %387 = vmatpush1.bf16.msra.mxu0 0
    %388 = vmatprep.subr.bf16.mxu0 0
    %389 = vmatpush1.bf16.msra.mxu0 0
    %390 = vmatprep.subr.bf16.mxu0 0
    %391 = vmatpush1.bf16.msra.mxu0 0
    %392 = vmatprep.subr.bf16.mxu0 0
    %393 = vmatpush1.bf16.msra.mxu0 0
    %394 = vmatprep.subr.bf16.mxu0 0
    %395 = vmatpush1.bf16.msra.mxu0 0
    %396 = vmatprep.subr.bf16.mxu0 0
    %397 = vmatpush1.bf16.msra.mxu0 0
    %398 = vmatprep.subr.bf16.mxu0 0
    %399 = vmatpush1.bf16.msra.mxu0 0
    %400 = vmatprep.subr.bf16.mxu0 0
    %401 = vmatpush1.bf16.msra.mxu0 0
    %402 = vmatprep.mubr.bf16.mxu0 0
    %403 = vmatmul.mubr.bf16.gmra.mrb[0].mxu0 %v289
    %v404 = vpop.f32.mrb[0].mxu0
    %v405 = vadd.f32 0.0, %v404
    %v406 = vpop.f32.mrb[0].mxu0
    %v407 = vpop.f32.mrb[0].mxu0
    %v408 = vpop.f32.mrb[0].mxu0
    %409 = vdwg.mxu0
    %v426 = vunpack.c.l.b16 %v290
    %v427 = vunpack.c.l.b16 %v291
    %v428 = vunpack.c.l.b16 %v292
    %v429 = vunpack.c.l.b16 %v293
    %v430 = vunpack.c.l.b16 %v294
    %v431 = vunpack.c.l.b16 %v295
    %v432 = vunpack.c.l.b16 %v296
    %v433 = vunpack.c.l.b16 %v297
    %v434 = vunpack.c.l.b16 %v298
    %v435 = vunpack.c.l.b16 %v299
    %v436 = vunpack.c.l.b16 %v300
    %v437 = vunpack.c.l.b16 %v301
    %v438 = vunpack.c.l.b16 %v302
    %v439 = vunpack.c.l.b16 %v303
    %v440 = vunpack.c.l.b16 %v304
    %v441 = vunpack.c.l.b16 %v305
    %v442 = vpack.c.b16 %v427, %v426
    %v443 = vpack.c.b16 %v429, %v428
    %v444 = vpack.c.b16 %v431, %v430
    %v445 = vpack.c.b16 %v433, %v432
    %v446 = vpack.c.b16 %v435, %v434
    %v447 = vpack.c.b16 %v437, %v436
    %v448 = vpack.c.b16 %v439, %v438
    %v449 = vpack.c.b16 %v441, %v440
    %458 = vmatprep.subr.bf16.mxu0 0
    %459 = vmatpush1.bf16.msra.mxu0 %v442
    %460 = vmatprep.subr.bf16.mxu0 0
    %461 = vmatpush1.bf16.msra.mxu0 %v443
    %462 = vmatprep.subr.bf16.mxu0 0
    %463 = vmatpush1.bf16.msra.mxu0 %v444
    %464 = vmatprep.subr.bf16.mxu0 0
    %465 = vmatpush1.bf16.msra.mxu0 %v445
    %466 = vmatprep.subr.bf16.mxu0 0
    %467 = vmatpush1.bf16.msra.mxu0 %v446
    %468 = vmatprep.subr.bf16.mxu0 0
    %469 = vmatpush1.bf16.msra.mxu0 %v447
    %470 = vmatprep.subr.bf16.mxu0 0
    %471 = vmatpush1.bf16.msra.mxu0 %v448
    %472 = vmatprep.subr.bf16.mxu0 0
    %473 = vmatpush1.bf16.msra.mxu0 %v449
    %474 = vmatprep.subr.bf16.mxu0 0
    %475 = vmatpush1.bf16.msra.mxu0 0
    %476 = vmatprep.subr.bf16.mxu0 0
    %477 = vmatpush1.bf16.msra.mxu0 0
    %478 = vmatprep.subr.bf16.mxu0 0
    %479 = vmatpush1.bf16.msra.mxu0 0
    %480 = vmatprep.subr.bf16.mxu0 0
    %481 = vmatpush1.bf16.msra.mxu0 0
    %482 = vmatprep.subr.bf16.mxu0 0
    %483 = vmatpush1.bf16.msra.mxu0 0
    %484 = vmatprep.subr.bf16.mxu0 0
    %485 = vmatpush1.bf16.msra.mxu0 0
    %486 = vmatprep.subr.bf16.mxu0 0
    %487 = vmatpush1.bf16.msra.mxu0 0
    %488 = vmatprep.subr.bf16.mxu0 0
    %489 = vmatpush1.bf16.msra.mxu0 0
    %490 = vmatprep.mubr.bf16.mxu0 0
    %491 = vmatmul.mubr.bf16.gmra.mrb[0].mxu0 %v184
    %v492 = vpop.f32.mrb[0].mxu0
    %v493 = vadd.f32 %v405, %v492
    %v494 = vpop.f32.mrb[0].mxu0
    %v495 = vpop.f32.mrb[0].mxu0
    %v496 = vpop.f32.mrb[0].mxu0
    %497 = vdwg.mxu0
    %v498 = vld [vmem:[%s3] sm:$0x1]
    %v500 = vlaneseq
    %v501 = vshrl.u32 %v500, 7
    %v502 = vsub.s32 0, %v501
    %v503 = vrot.slane %v498, %v502
    %v505 = vadd.f32 %v493, %v503
    %v506 = vxor.u32 %v505, 2147483648
    %v507 = vmul.f32 %v506, 1.442695
    %v508 = vpow.pop %v507
    %v509 = vadd.f32 %v508, 1.0
    %v510 = vrcp.pop %v509
    %v511 = vmul.f32 1.0, %v510
    %v512 = vmul.f32 %v505, %v511
    %v513 = vpack.c.bf16 %v512, %v512
    %v514 = vld [vmem:[#allocation7] sm:$0xf]
    %v515 = vld [vmem:[#allocation7 + $0x4] sm:$0xf]
    %v516 = vld [vmem:[#allocation7 + $0x8] sm:$0xf]
    %v517 = vld [vmem:[#allocation7 + $0xc] sm:$0xf]
    %v518 = vld [vmem:[#allocation7 + $0x10] sm:$0xf]
    %v519 = vld [vmem:[#allocation7 + $0x14] sm:$0xf]
    %v520 = vld [vmem:[#allocation7 + $0x18] sm:$0xf]
    %v521 = vld [vmem:[#allocation7 + $0x1c] sm:$0xf]
    %v522 = vld [vmem:[#allocation7 + $0x20] sm:$0xf]
    %v523 = vld [vmem:[#allocation7 + $0x24] sm:$0xf]
    %v524 = vld [vmem:[#allocation7 + $0x28] sm:$0xf]
    %v525 = vld [vmem:[#allocation7 + $0x2c] sm:$0xf]
    %v526 = vld [vmem:[#allocation7 + $0x30] sm:$0xf]
    %v527 = vld [vmem:[#allocation7 + $0x34] sm:$0xf]
    %v528 = vld [vmem:[#allocation7 + $0x38] sm:$0xf]
    %v529 = vld [vmem:[#allocation7 + $0x3c] sm:$0xf]
    %v530 = vld [vmem:[%s5] sm:$0x1]
    %v532 = vlaneseq
    %v533 = vshrl.u32 %v532, 7
    %v534 = vsub.s32 0, %v533
    %v535 = vrot.slane %v530, %v534
    %v553 = vunpack.c.l.b16 %v514
    %v554 = vunpack.c.l.b16 %v515
    %v555 = vunpack.c.l.b16 %v516
    %v556 = vunpack.c.l.b16 %v517
    %v557 = vunpack.c.l.b16 %v518
    %v558 = vunpack.c.l.b16 %v519
    %v559 = vunpack.c.l.b16 %v520
    %v560 = vunpack.c.l.b16 %v521
    %v561 = vunpack.c.l.b16 %v522
    %v562 = vunpack.c.l.b16 %v523
    %v563 = vunpack.c.l.b16 %v524
    %v564 = vunpack.c.l.b16 %v525
    %v565 = vunpack.c.l.b16 %v526
    %v566 = vunpack.c.l.b16 %v527
    %v567 = vunpack.c.l.b16 %v528
    %v568 = vunpack.c.l.b16 %v529
    %v569 = vpack.c.b16 %v554, %v553
    %v570 = vpack.c.b16 %v556, %v555
    %v571 = vpack.c.b16 %v558, %v557
    %v572 = vpack.c.b16 %v560, %v559
    %v573 = vpack.c.b16 %v562, %v561
    %v574 = vpack.c.b16 %v564, %v563
    %v575 = vpack.c.b16 %v566, %v565
    %v576 = vpack.c.b16 %v568, %v567
    %585 = vmatprep.subr.bf16.mxu0 0
    %586 = vmatpush1.bf16.msra.mxu0 %v569
    %587 = vmatprep.subr.bf16.mxu0 0
    %588 = vmatpush1.bf16.msra.mxu0 %v570
    %589 = vmatprep.subr.bf16.mxu0 0
    %590 = vmatpush1.bf16.msra.mxu0 %v571
    %591 = vmatprep.subr.bf16.mxu0 0
    %592 = vmatpush1.bf16.msra.mxu0 %v572
    %593 = vmatprep.subr.bf16.mxu0 0
    %594 = vmatpush1.bf16.msra.mxu0 %v573
    %595 = vmatprep.subr.bf16.mxu0 0
    %596 = vmatpush1.bf16.msra.mxu0 %v574
    %597 = vmatprep.subr.bf16.mxu0 0
    %598 = vmatpush1.bf16.msra.mxu0 %v575
    %599 = vmatprep.subr.bf16.mxu0 0
    %600 = vmatpush1.bf16.msra.mxu0 %v576
    %601 = vmatprep.subr.bf16.mxu0 0
    %602 = vmatpush1.bf16.msra.mxu0 0
    %603 = vmatprep.subr.bf16.mxu0 0
    %604 = vmatpush1.bf16.msra.mxu0 0
    %605 = vmatprep.subr.bf16.mxu0 0
    %606 = vmatpush1.bf16.msra.mxu0 0
    %607 = vmatprep.subr.bf16.mxu0 0
    %608 = vmatpush1.bf16.msra.mxu0 0
    %609 = vmatprep.subr.bf16.mxu0 0
    %610 = vmatpush1.bf16.msra.mxu0 0
    %611 = vmatprep.subr.bf16.mxu0 0
    %612 = vmatpush1.bf16.msra.mxu0 0
    %613 = vmatprep.subr.bf16.mxu0 0
    %614 = vmatpush1.bf16.msra.mxu0 0
    %615 = vmatprep.subr.bf16.mxu0 0
    %616 = vmatpush1.bf16.msra.mxu0 0
    %617 = vmatprep.mubr.bf16.mxu0 0
    %618 = vmatmul.mubr.bf16.gmra.mrb[0].mxu0 %v513
    %v619 = vpop.f32.mrb[0].mxu0
    %v620 = vadd.f32 %v535, %v619
    %v621 = vpop.f32.mrb[0].mxu0
    %v622 = vpop.f32.mrb[0].mxu0
    %v623 = vpop.f32.mrb[0].mxu0
    %624 = vdwg.mxu0
    %625 = vst [vmem:[#allocation8] sm:$0xff] %v620
    // Predicated region
    $region38: #{tpu_custom_call.1} parent=1 // pred_check
      _
    $region39: #{tpu_custom_call.1} parent=1 // pred_check_branch
      %627 = sbr.rel (0) target = $region41
    $region40: #{tpu_custom_call.1} parent=1 // pred_region
      %s629 = ssub.s32 128, 128
      %630 = vsyncadd [#allocation4], %s629
      %s632 = sshll.u32 [#allocation8], 4
      %s633 = int_to_ptr.vmem [resolvable:$true] %s632
      %635 = dma.vmem_to_hbm [thread:$0]  %s633, 128, %s6, [#allocation4]
    $region41: #{tpu_custom_call.1} parent=1 // pred_fallthru
      _
    // Predicated region
    $region42: #{tpu_custom_call.1} parent=1 // pred_check
      _
    $region43: #{tpu_custom_call.1} parent=1 // pred_check_branch
      %637 = sbr.rel (0) target = $region45
    $region44: #{tpu_custom_call.1} parent=1 // pred_region
      %638 = dma.done [#allocation4], 128
    $region45: #{tpu_custom_call.1} parent=1 // pred_fallthru
      _
    %639 = vsyncpa [#allocation3], 1
    %640 = vsyncpa [#allocation6], 1
    %641 = vsyncpa [#allocation4], 1

</llo_original>
